<compile_context>
chip_gen: v7x
topology: tpu7x:2x2x1
jax: 0.10.0
libtpu: 0.0.40
codegen_flags: <defaults>
</compile_context>

<pallas_src>
import math

import jax
import jax.numpy as jnp
from jax.experimental import pallas as pl
from jax.experimental.pallas import tpu as pltpu

# ----- config (consistent with the module's shapes) ---------------------------
B = 2            # batch
S = 8            # sequence length (q_len == kv_seq_len, causal, no cache)
H = 32           # hidden_size
NQ = 4           # num_attention_heads
NKV = 2          # num_key_value_heads
HD = H // NQ     # head_dim = 8
HD2 = HD // 2
NREP = NQ // NKV
THETA = 10000.0

BS = B * S       # rows after folding batch into sublanes (16)
NS = NQ * BS     # rows after stacking heads (64)
QW = NQ * HD     # 32
KW = NKV * HD    # 16


# ----- fused attention kernel (whole batch, single grid step) -----------------
def attn_kernel(x_ref, wqkv_ref, wo_ref, trig_ref, mask_ref, o_ref):
    x = x_ref[...]                                                     # (BS, H)

    # one fused QKV matmul (scale + RoPE de-interleave already folded in wqkv)
    qkv = jnp.dot(x, wqkv_ref[...], preferred_element_type=jnp.float32)  # (BS, 64)
    q = qkv[:, :QW]                                                    # (BS, 32)
    k = qkv[:, QW:QW + KW]                                             # (BS, 16)
    v = qkv[:, QW + KW:]                                               # (BS, 16)

    # stack heads along sublanes; GQA k/v repetition folded into the slicing
    q_st = jnp.concatenate([q[:, h * HD:(h + 1) * HD] for h in range(NQ)],
                           axis=0)                                     # (NS, HD)
    k_st = jnp.concatenate(
        [k[:, (h // NREP) * HD:((h // NREP) + 1) * HD] for h in range(NQ)],
        axis=0)                                                        # (NS, HD)
    v_st = jnp.concatenate(
        [v[:, (h // NREP) * HD:((h // NREP) + 1) * HD] for h in range(NQ)],
        axis=0)                                                        # (NS, HD)

    trig = trig_ref[...]                                               # (NS, HD)
    cos = trig[:, :HD2]
    sin = trig[:, HD2:]

    def rope(t):  # half-layout rotary (weights were de-interleaved at init)
        t1 = t[:, :HD2]
        t2 = t[:, HD2:]
        return jnp.concatenate([t1 * cos - t2 * sin, t1 * sin + t2 * cos],
                               axis=-1)

    q_st = rope(q_st)
    k_st = rope(k_st)

    # all heads / all batches in one scores matmul; mask enforces
    # head-block, batch-block and causal structure.
    s = jax.lax.dot_general(q_st, k_st, (((1,), (1,)), ((), ())),
                            preferred_element_type=jnp.float32)        # (NS, NS)
    s = s + mask_ref[...]
    m = jnp.max(s, axis=-1, keepdims=True)
    p = jnp.exp(s - m)
    p = p * pl.reciprocal(jnp.sum(p, axis=-1, keepdims=True), approx=True)

    o_st = jnp.dot(p, v_st, preferred_element_type=jnp.float32)        # (NS, HD)

    # un-stack heads back to (BS, NQ*HD), then output projection
    attn = jnp.concatenate([o_st[h * BS:(h + 1) * BS, :] for h in range(NQ)],
                           axis=1)                                     # (BS, H)
    o_ref[...] = jnp.dot(attn, wo_ref[...],
                         preferred_element_type=jnp.float32).astype(o_ref.dtype)


# ----- init-time packing (constant folding, done once in plain JAX) -----------
def pack_params(wq, wk, wv, wo):
    # de-interleave RoPE pairs inside each head: [0,2,4,6,1,3,5,7]
    perm = jnp.concatenate([jnp.arange(0, HD, 2), jnp.arange(1, HD, 2)])

    def deinterleave(w, nh):
        return w.reshape(H, nh, HD)[:, :, perm].reshape(H, nh * HD)

    wq_p = deinterleave(wq, NQ) * (1.0 / math.sqrt(HD))   # fold softmax scale
    wk_p = deinterleave(wk, NKV)
    wqkv = jnp.concatenate([wq_p, wk_p, wv], axis=1)      # (H, 64)

    # half-layout rotary tables, one row per stacked (head, batch, pos) row
    inv = 1.0 / THETA ** (jnp.arange(0, HD, 2, dtype=jnp.float32) / HD)
    pos = (jnp.arange(NS) % S).astype(jnp.float32)
    ang = pos[:, None] * inv[None, :]                     # (NS, HD2)
    trig = jnp.concatenate([jnp.cos(ang), jnp.sin(ang)], axis=1)  # (NS, HD)

    # additive mask: keep only same-head, same-batch, causal entries
    r = jnp.arange(NS)
    hh = r // BS
    bb = (r // S) % B
    ss = r % S
    keep = ((hh[:, None] == hh[None, :]) & (bb[:, None] == bb[None, :])
            & (ss[None, :] <= ss[:, None]))
    mask = jnp.where(keep, 0.0, -1e30).astype(jnp.float32)  # (NS, NS)

    return wqkv, jnp.asarray(wo), trig, mask


# ----- wrapper -----------------------------------------------------------------
@jax.jit
def demo_attention(x, wqkv, wo, trig, mask):
    x2d = x.reshape(BS, H)

    def full(a):
        return pl.BlockSpec(a.shape, lambda i, nd=a.ndim: (0,) * nd)

    out2d = pl.pallas_call(
        attn_kernel,
        out_shape=jax.ShapeDtypeStruct((BS, H), x.dtype),
        grid=(1,),
        in_specs=[full(x2d), full(wqkv), full(wo), full(trig), full(mask)],
        out_specs=pl.BlockSpec((BS, H), lambda i: (0, 0)),
        compiler_params=pltpu.CompilerParams(
            dimension_semantics=("arbitrary",)),
    )(x2d, wqkv, wo, trig, mask)
    return out2d.reshape(B, S, H)


# ----- pure-JAX reference (mirrors the PyTorch DemoAttention forward) ----------
def ref_attention(x, wq, wk, wv, wo):
    q = (x @ wq).reshape(B, S, NQ, HD).transpose(0, 2, 1, 3)    # (B, NQ, S, HD)
    k = (x @ wk).reshape(B, S, NKV, HD).transpose(0, 2, 1, 3)   # (B, NKV, S, HD)
    v = (x @ wv).reshape(B, S, NKV, HD).transpose(0, 2, 1, 3)

    inv = 1.0 / THETA ** (jnp.arange(0, HD, 2, dtype=jnp.float32) / HD)
    ang = jnp.arange(S, dtype=jnp.float32)[:, None] * inv[None, :]
    c, s = jnp.cos(ang), jnp.sin(ang)                           # (S, HD2)

    def rope(t):  # interleaved (view_as_complex) rotary
        tr = t.reshape(*t.shape[:-1], HD2, 2)
        re, im = tr[..., 0], tr[..., 1]
        return jnp.stack([re * c - im * s, re * s + im * c], axis=-1).reshape(t.shape)

    q, k = rope(q), rope(k)
    k = jnp.repeat(k, NREP, axis=1)
    v = jnp.repeat(v, NREP, axis=1)

    scores = jnp.einsum('bhqd,bhkd->bhqk', q, k) / math.sqrt(HD)
    causal = jnp.where(jnp.arange(S)[None, :] > jnp.arange(S)[:, None],
                       -jnp.inf, 0.0)
    p = jax.nn.softmax(scores + causal[None, None], axis=-1)
    attn = jnp.einsum('bhqk,bhkd->bhqd', p, v)
    return attn.transpose(0, 2, 1, 3).reshape(B, S, NQ * HD) @ wo


if __name__ == "__main__":
    key = jax.random.PRNGKey(0)
    kx, k0, k1, k2, k3 = jax.random.split(key, 5)
    x = jax.random.normal(kx, (B, S, H), jnp.float32)
    sc = 0.02
    wq = sc * jax.random.normal(k0, (H, NQ * HD), jnp.float32)   # q_proj.weight.T
    wk = sc * jax.random.normal(k1, (H, NKV * HD), jnp.float32)  # k_proj.weight.T
    wv = sc * jax.random.normal(k2, (H, NKV * HD), jnp.float32)  # v_proj.weight.T
    wo = sc * jax.random.normal(k3, (NQ * HD, H), jnp.float32)   # o_proj.weight.T

    wqkv, wo_p, trig, mask = pack_params(wq, wk, wv, wo)
    out = demo_attention(x, wqkv, wo_p, trig, mask)
    out = jax.block_until_ready(out)

    ref = ref_attention(x, wq, wk, wv, wo)
    assert out.shape == (B, S, H)
    max_err = float(jnp.max(jnp.abs(out - ref)))
    assert jnp.allclose(out, ref, rtol=1e-4, atol=1e-4), max_err

    # TODO(synk): KV-cache (past_key_value/use_cache) path and attention dropout
    # are not exercised by this forward (cache=None, dropout=0.0).
    print("KERNEL_OK")
</pallas_src>

<mosaic_0001>
module attributes {stable_mosaic.version = 11 : i64} {
  func.func @attn_kernel(%arg0: i32, %arg1: memref<16x32xf32, #tpu.memory_space<vmem>>, %arg2: memref<32x64xf32, #tpu.memory_space<vmem>>, %arg3: memref<32x32xf32, #tpu.memory_space<vmem>>, %arg4: memref<64x8xf32, #tpu.memory_space<vmem>>, %arg5: memref<64x64xf32, #tpu.memory_space<vmem>>, %arg6: memref<16x32xf32, #tpu.memory_space<vmem>>) attributes {dimension_semantics = [#tpu.dimension_semantics<arbitrary>], iteration_bounds = array<i64: 1>, scalar_prefetch = 0 : i64, scratch_operands = 0 : i64, tpu.core_type = #tpu.core_type<tc>, window_params = [{pipeline_mode = #tpu.pipeline_mode<synchronous>, transform_indices = @transform_0, window_bounds = array<i64: 16, 32>}, {pipeline_mode = #tpu.pipeline_mode<synchronous>, transform_indices = @transform_1, window_bounds = array<i64: 32, 64>}, {pipeline_mode = #tpu.pipeline_mode<synchronous>, transform_indices = @transform_2, window_bounds = array<i64: 32, 32>}, {pipeline_mode = #tpu.pipeline_mode<synchronous>, transform_indices = @transform_3, window_bounds = array<i64: 64, 8>}, {pipeline_mode = #tpu.pipeline_mode<synchronous>, transform_indices = @transform_4, window_bounds = array<i64: 64, 64>}, {pipeline_mode = #tpu.pipeline_mode<synchronous>, transform_indices = @transform_5, window_bounds = array<i64: 16, 32>}]} {
    %c0 = arith.constant 0 : index
    %c0_0 = arith.constant 0 : index
    %0 = vector.load %arg1[%c0, %c0_0] : memref<16x32xf32, #tpu.memory_space<vmem>>, vector<16x32xf32>
    %c0_1 = arith.constant 0 : index
    %c0_2 = arith.constant 0 : index
    %1 = vector.load %arg2[%c0_1, %c0_2] : memref<32x64xf32, #tpu.memory_space<vmem>>, vector<32x64xf32>
    %cst = arith.constant dense<0.000000e+00> : vector<16x64xf32>
    %2 = tpu.matmul %0, %1, %cst {dimension_numbers = #tpu.dot_dimension_numbers<[1], [0], [0], [1], [0, 0, 1, 1], [], []>} : vector<16x32xf32>, vector<32x64xf32>, vector<16x64xf32> -> vector<16x64xf32>
    %3 = vector.extract_strided_slice %2 {offsets = [0, 0], sizes = [16, 32], strides = [1, 1]} : vector<16x64xf32> to vector<16x32xf32>
    %4 = vector.extract_strided_slice %2 {offsets = [0, 32], sizes = [16, 16], strides = [1, 1]} : vector<16x64xf32> to vector<16x16xf32>
    %5 = vector.extract_strided_slice %2 {offsets = [0, 48], sizes = [16, 16], strides = [1, 1]} : vector<16x64xf32> to vector<16x16xf32>
    %6 = vector.extract_strided_slice %3 {offsets = [0, 0], sizes = [16, 8], strides = [1, 1]} : vector<16x32xf32> to vector<16x8xf32>
    %7 = vector.extract_strided_slice %3 {offsets = [0, 8], sizes = [16, 8], strides = [1, 1]} : vector<16x32xf32> to vector<16x8xf32>
    %8 = vector.extract_strided_slice %3 {offsets = [0, 16], sizes = [16, 8], strides = [1, 1]} : vector<16x32xf32> to vector<16x8xf32>
    %9 = vector.extract_strided_slice %3 {offsets = [0, 24], sizes = [16, 8], strides = [1, 1]} : vector<16x32xf32> to vector<16x8xf32>
    %10 = tpu.concatenate %6, %7, %8, %9 in 0 : vector<16x8xf32>, vector<16x8xf32>, vector<16x8xf32>, vector<16x8xf32> -> vector<64x8xf32>
    %11 = vector.extract_strided_slice %4 {offsets = [0, 0], sizes = [16, 8], strides = [1, 1]} : vector<16x16xf32> to vector<16x8xf32>
    %12 = vector.extract_strided_slice %4 {offsets = [0, 0], sizes = [16, 8], strides = [1, 1]} : vector<16x16xf32> to vector<16x8xf32>
    %13 = vector.extract_strided_slice %4 {offsets = [0, 8], sizes = [16, 8], strides = [1, 1]} : vector<16x16xf32> to vector<16x8xf32>
    %14 = vector.extract_strided_slice %4 {offsets = [0, 8], sizes = [16, 8], strides = [1, 1]} : vector<16x16xf32> to vector<16x8xf32>
    %15 = tpu.concatenate %11, %12, %13, %14 in 0 : vector<16x8xf32>, vector<16x8xf32>, vector<16x8xf32>, vector<16x8xf32> -> vector<64x8xf32>
    %16 = vector.extract_strided_slice %5 {offsets = [0, 0], sizes = [16, 8], strides = [1, 1]} : vector<16x16xf32> to vector<16x8xf32>
    %17 = vector.extract_strided_slice %5 {offsets = [0, 0], sizes = [16, 8], strides = [1, 1]} : vector<16x16xf32> to vector<16x8xf32>
    %18 = vector.extract_strided_slice %5 {offsets = [0, 8], sizes = [16, 8], strides = [1, 1]} : vector<16x16xf32> to vector<16x8xf32>
    %19 = vector.extract_strided_slice %5 {offsets = [0, 8], sizes = [16, 8], strides = [1, 1]} : vector<16x16xf32> to vector<16x8xf32>
    %20 = tpu.concatenate %16, %17, %18, %19 in 0 : vector<16x8xf32>, vector<16x8xf32>, vector<16x8xf32>, vector<16x8xf32> -> vector<64x8xf32>
    %c0_3 = arith.constant 0 : index
    %c0_4 = arith.constant 0 : index
    %21 = vector.load %arg4[%c0_3, %c0_4] : memref<64x8xf32, #tpu.memory_space<vmem>>, vector<64x8xf32>
    %22 = vector.extract_strided_slice %21 {offsets = [0, 0], sizes = [64, 4], strides = [1, 1]} : vector<64x8xf32> to vector<64x4xf32>
    %23 = vector.extract_strided_slice %21 {offsets = [0, 4], sizes = [64, 4], strides = [1, 1]} : vector<64x8xf32> to vector<64x4xf32>
    %24 = vector.extract_strided_slice %10 {offsets = [0, 0], sizes = [64, 4], strides = [1, 1]} : vector<64x8xf32> to vector<64x4xf32>
    %25 = vector.extract_strided_slice %10 {offsets = [0, 4], sizes = [64, 4], strides = [1, 1]} : vector<64x8xf32> to vector<64x4xf32>
    %26 = arith.mulf %24, %22 : vector<64x4xf32>
    %27 = arith.mulf %25, %23 : vector<64x4xf32>
    %28 = arith.subf %26, %27 : vector<64x4xf32>
    %29 = arith.mulf %24, %23 : vector<64x4xf32>
    %30 = arith.mulf %25, %22 : vector<64x4xf32>
    %31 = arith.addf %29, %30 : vector<64x4xf32>
    %32 = tpu.concatenate %28, %31 in 1 : vector<64x4xf32>, vector<64x4xf32> -> vector<64x8xf32>
    %33 = vector.extract_strided_slice %15 {offsets = [0, 0], sizes = [64, 4], strides = [1, 1]} : vector<64x8xf32> to vector<64x4xf32>
    %34 = vector.extract_strided_slice %15 {offsets = [0, 4], sizes = [64, 4], strides = [1, 1]} : vector<64x8xf32> to vector<64x4xf32>
    %35 = arith.mulf %33, %22 : vector<64x4xf32>
    %36 = arith.mulf %34, %23 : vector<64x4xf32>
    %37 = arith.subf %35, %36 : vector<64x4xf32>
    %38 = arith.mulf %33, %23 : vector<64x4xf32>
    %39 = arith.mulf %34, %22 : vector<64x4xf32>
    %40 = arith.addf %38, %39 : vector<64x4xf32>
    %41 = tpu.concatenate %37, %40 in 1 : vector<64x4xf32>, vector<64x4xf32> -> vector<64x8xf32>
    %cst_5 = arith.constant dense<0.000000e+00> : vector<64x64xf32>
    %42 = tpu.matmul %32, %41, %cst_5 {dimension_numbers = #tpu.dot_dimension_numbers<[1], [1], [0], [0], [0, 0, 1, 0], [], []>} : vector<64x8xf32>, vector<64x8xf32>, vector<64x64xf32> -> vector<64x64xf32>
    %c0_6 = arith.constant 0 : index
    %c0_7 = arith.constant 0 : index
    %43 = vector.load %arg5[%c0_6, %c0_7] : memref<64x64xf32, #tpu.memory_space<vmem>>, vector<64x64xf32>
    %44 = arith.addf %42, %43 : vector<64x64xf32>
    %cst_8 = arith.constant dense<0xFF800000> : vector<64xf32>
    %45 = vector.multi_reduction <maximumf>, %44, %cst_8 [1] : vector<64x64xf32> to vector<64xf32>
    %46 = vector.shape_cast %45 : vector<64xf32> to vector<64x1xf32>
    %47 = vector.broadcast %46 : vector<64x1xf32> to vector<64x64xf32>
    %48 = arith.subf %44, %47 : vector<64x64xf32>
    %49 = math.exp %48 : vector<64x64xf32>
    %cst_9 = arith.constant dense<0.000000e+00> : vector<64xf32>
    %50 = vector.multi_reduction <add>, %49, %cst_9 [1] : vector<64x64xf32> to vector<64xf32>
    %51 = vector.shape_cast %50 : vector<64xf32> to vector<64x1xf32>
    %52 = tpu.reciprocal %51 {approx = true} : vector<64x1xf32> -> vector<64x1xf32>
    %53 = vector.broadcast %52 : vector<64x1xf32> to vector<64x64xf32>
    %54 = arith.mulf %49, %53 : vector<64x64xf32>
    %cst_10 = arith.constant dense<0.000000e+00> : vector<64x8xf32>
    %55 = tpu.matmul %54, %20, %cst_10 {dimension_numbers = #tpu.dot_dimension_numbers<[1], [0], [0], [1], [0, 0, 1, 1], [], []>} : vector<64x64xf32>, vector<64x8xf32>, vector<64x8xf32> -> vector<64x8xf32>
    %56 = vector.extract_strided_slice %55 {offsets = [0, 0], sizes = [16, 8], strides = [1, 1]} : vector<64x8xf32> to vector<16x8xf32>
    %57 = vector.extract_strided_slice %55 {offsets = [16, 0], sizes = [16, 8], strides = [1, 1]} : vector<64x8xf32> to vector<16x8xf32>
    %58 = vector.extract_strided_slice %55 {offsets = [32, 0], sizes = [16, 8], strides = [1, 1]} : vector<64x8xf32> to vector<16x8xf32>
    %59 = vector.extract_strided_slice %55 {offsets = [48, 0], sizes = [16, 8], strides = [1, 1]} : vector<64x8xf32> to vector<16x8xf32>
    %60 = tpu.concatenate %56, %57, %58, %59 in 1 : vector<16x8xf32>, vector<16x8xf32>, vector<16x8xf32>, vector<16x8xf32> -> vector<16x32xf32>
    %c0_11 = arith.constant 0 : index
    %c0_12 = arith.constant 0 : index
    %61 = vector.load %arg3[%c0_11, %c0_12] : memref<32x32xf32, #tpu.memory_space<vmem>>, vector<32x32xf32>
    %cst_13 = arith.constant dense<0.000000e+00> : vector<16x32xf32>
    %62 = tpu.matmul %60, %61, %cst_13 {dimension_numbers = #tpu.dot_dimension_numbers<[1], [0], [0], [1], [0, 0, 1, 1], [], []>} : vector<16x32xf32>, vector<32x32xf32>, vector<16x32xf32> -> vector<16x32xf32>
    %c0_14 = arith.constant 0 : index
    %c0_15 = arith.constant 0 : index
    %63 = vector.load %arg6[%c0_14, %c0_15] : memref<16x32xf32, #tpu.memory_space<vmem>>, vector<16x32xf32>
    tpu.vector_store %arg6[%c0_14, %c0_15], %62 {strides = array<i32>} : memref<16x32xf32, #tpu.memory_space<vmem>>, vector<16x32xf32>,
    return
  }
  func.func @transform_0(%arg0: i32) -> (i32, i32) {
    %c0_i32 = arith.constant 0 : i32
    %c0_i32_0 = arith.constant 0 : i32
    %c0_i32_1 = arith.constant 0 : i32
    return %c0_i32, %c0_i32_0 : i32, i32
  }
  func.func @transform_1(%arg0: i32) -> (i32, i32) {
    %c0_i32 = arith.constant 0 : i32
    %c0_i32_0 = arith.constant 0 : i32
    %c0_i32_1 = arith.constant 0 : i32
    return %c0_i32, %c0_i32_0 : i32, i32
  }
  func.func @transform_2(%arg0: i32) -> (i32, i32) {
    %c0_i32 = arith.constant 0 : i32
    %c0_i32_0 = arith.constant 0 : i32
    %c0_i32_1 = arith.constant 0 : i32
    return %c0_i32, %c0_i32_0 : i32, i32
  }
  func.func @transform_3(%arg0: i32) -> (i32, i32) {
    %c0_i32 = arith.constant 0 : i32
    %c0_i32_0 = arith.constant 0 : i32
    %c0_i32_1 = arith.constant 0 : i32
    return %c0_i32, %c0_i32_0 : i32, i32
  }
  func.func @transform_4(%arg0: i32) -> (i32, i32) {
    %c0_i32 = arith.constant 0 : i32
    %c0_i32_0 = arith.constant 0 : i32
    %c0_i32_1 = arith.constant 0 : i32
    return %c0_i32, %c0_i32_0 : i32, i32
  }
  func.func @transform_5(%arg0: i32) -> (i32, i32) {
    %c0_i32 = arith.constant 0 : i32
    %c0_i32_0 = arith.constant 0 : i32
    %c0_i32_1 = arith.constant 0 : i32
    return %c0_i32, %c0_i32_0 : i32, i32
  }
}

</mosaic_0001>

<llo_original>
// kernel: demo_attention.1
$region0: #{demo_attention.1}
  #allocation0 [shape = 'u32[]', space=smem, size = 0x4, offset = 0x4, fixed_abs, tag = 'smem constant byte address 0x4 - core index']
  #allocation1 [shape = 'u32[144,128]{1,0:T(1,128)}', space=vmem, size = 0x12000, scoped, tag = 'internal scratch']
  %s0 = inlined_call_operand.vmem [shape: f32[16,32], index: 0, kind: input, shape index: {}]
  %s1 = inlined_call_operand.hbm [shape: f32[32,64], index: 1, kind: input, shape index: {}]
  %s2 = inlined_call_operand.hbm [shape: f32[32,32], index: 2, kind: input, shape index: {}]
  %s3 = inlined_call_operand.vmem [shape: f32[64,8], index: 3, kind: input, shape index: {}]
  %s4 = inlined_call_operand.vmem [shape: f32[64,64], index: 4, kind: input, shape index: {}]
  %s5 = inlined_call_operand.hbm [shape: f32[16,32], index: 5, kind: output, shape index: {}]
  %s6 = sld [smem:[#allocation0]]
  $region38: #{demo_attention.1} parent=0
    _
  %s8 = ssub.s32 1, %s6
  %s9 = scalar_select 0, %s8, %s6
  $region1: #{demo_attention.1} parent=0
    #allocation2 [shape = 'u8[16384]{0}', space=vmem, size = 0x4000, scoped, tag = 'input window, operand 1, single buffered']
    #allocation3 [shape = 's32[1]{0}', space=sflag, size = 0x4, scoped, tag = 'scoped memory for demo_attention.1']
    #allocation4 [shape = 's32[1]{0}', space=sflag, size = 0x4, scoped, tag = 'scoped memory for demo_attention.1']
    #allocation5 [shape = 'u8[16384]{0}', space=vmem, size = 0x4000, scoped, tag = 'input window, operand 2, single buffered']
    #allocation6 [shape = 's32[1]{0}', space=sflag, size = 0x4, scoped, tag = 'scoped memory for demo_attention.1']
    #allocation7 [shape = 'u8[8192]{0}', space=vmem, size = 0x2000, scoped, tag = 'output window, operand 0, single buffered']
    %10 = vsyncpa [#allocation3], 0
    %11 = vsyncpa [#allocation6], 0
    %12 = vsyncpa [#allocation4], 0
    // Predicated region
    $region2: #{demo_attention.1} parent=1 // pred_check
      _
    $region3: #{demo_attention.1} parent=1 // pred_check_branch
      %14 = sbr.rel (0) target = $region5
    $region4: #{demo_attention.1} parent=1 // pred_region
      _
    $region5: #{demo_attention.1} parent=1 // pred_fallthru
      _
    // Predicated region
    $region6: #{demo_attention.1} parent=1 // pred_check
      _
    $region7: #{demo_attention.1} parent=1 // pred_check_branch
      %16 = sbr.rel (0) target = $region9
    $region8: #{demo_attention.1} parent=1 // pred_region
      %s18 = ssub.s32 512, 512
      %19 = vsyncadd [#allocation3], %s18
      %s20 = sshll.u32 [#allocation2], 4
      %s21 = int_to_ptr.vmem [resolvable:$true] %s20
      %26 = dma.hbm_to_vmem [thread:$0]  %s1, 512, %s21, [#allocation3], 128, 128, 8
    $region9: #{demo_attention.1} parent=1 // pred_fallthru
      _
    // Predicated region
    $region10: #{demo_attention.1} parent=1 // pred_check
      _
    $region11: #{demo_attention.1} parent=1 // pred_check_branch
      %28 = sbr.rel (0) target = $region13
    $region12: #{demo_attention.1} parent=1 // pred_region
      %s30 = ssub.s32 512, 512
      %31 = vsyncadd [#allocation6], %s30
      %s32 = sshll.u32 [#allocation5], 4
      %s33 = int_to_ptr.vmem [resolvable:$true] %s32
      %38 = dma.hbm_to_vmem [thread:$0]  %s2, 512, %s33, [#allocation6], 128, 128, 8
    $region13: #{demo_attention.1} parent=1 // pred_fallthru
      _
    // Predicated region
    $region14: #{demo_attention.1} parent=1 // pred_check
      _
    $region15: #{demo_attention.1} parent=1 // pred_check_branch
      %40 = sbr.rel (0) target = $region17
    $region16: #{demo_attention.1} parent=1 // pred_region
      _
    $region17: #{demo_attention.1} parent=1 // pred_fallthru
      _
    // Predicated region
    $region18: #{demo_attention.1} parent=1 // pred_check
      _
    $region19: #{demo_attention.1} parent=1 // pred_check_branch
      %42 = sbr.rel (0) target = $region21
    $region20: #{demo_attention.1} parent=1 // pred_region
      _
    $region21: #{demo_attention.1} parent=1 // pred_fallthru
      _
    // Predicated region
    $region22: #{demo_attention.1} parent=1 // pred_check
      _
    $region23: #{demo_attention.1} parent=1 // pred_check_branch
      %44 = sbr.rel (0) target = $region25
    $region24: #{demo_attention.1} parent=1 // pred_region
      %45 = dma.done [#allocation3], 512
    $region25: #{demo_attention.1} parent=1 // pred_fallthru
      _
    // Predicated region
    $region26: #{demo_attention.1} parent=1 // pred_check
      _
    $region27: #{demo_attention.1} parent=1 // pred_check_branch
      %47 = sbr.rel (0) target = $region29
    $region28: #{demo_attention.1} parent=1 // pred_region
      %48 = dma.done [#allocation6], 512
    $region29: #{demo_attention.1} parent=1 // pred_fallthru
      _
    %v49 = vld [vmem:[%s0] sm:$0xff]
    %v50 = vld [vmem:[%s0 + $0x8] sm:$0xff]
    %v51 = vld [vmem:[#allocation2] sm:$0xff]
    %v52 = vld [vmem:[#allocation2 + $0x8] sm:$0xff]
    %v53 = vld [vmem:[#allocation2 + $0x10] sm:$0xff]
    %v54 = vld [vmem:[#allocation2 + $0x18] sm:$0xff]
    %vm55 = vcmask 261120
    %v57 = vsel %vm55, %v49, 0
    %v60 = vsel %vm55, %v50, 0
    %62 = vmatprep.subr.mxu0 0.0
    %63 = vmatpush1.msra.mxu0 %v51
    %64 = vmatprep.subr.mxu0 0.0
    %65 = vmatpush1.msra.mxu0 %v52
    %66 = vmatprep.subr.mxu0 0.0
    %67 = vmatpush1.msra.mxu0 %v53
    %68 = vmatprep.subr.mxu0 0.0
    %69 = vmatpush1.msra.mxu0 %v54
    %70 = vmatprep.subr.mxu0 0.0
    %71 = vmatpush1.msra.mxu0 0.0
    %72 = vmatprep.subr.mxu0 0.0
    %73 = vmatpush1.msra.mxu0 0.0
    %74 = vmatprep.subr.mxu0 0.0
    %75 = vmatpush1.msra.mxu0 0.0
    %76 = vmatprep.subr.mxu0 0.0
    %77 = vmatpush1.msra.mxu0 0.0
    %78 = vmatprep.subr.mxu0 0.0
    %79 = vmatpush1.msra.mxu0 0.0
    %80 = vmatprep.subr.mxu0 0.0
    %81 = vmatpush1.msra.mxu0 0.0
    %82 = vmatprep.subr.mxu0 0.0
    %83 = vmatpush1.msra.mxu0 0.0
    %84 = vmatprep.subr.mxu0 0.0
    %85 = vmatpush1.msra.mxu0 0.0
    %86 = vmatprep.subr.mxu0 0.0
    %87 = vmatpush1.msra.mxu0 0.0
    %88 = vmatprep.subr.mxu0 0.0
    %89 = vmatpush1.msra.mxu0 0.0
    %90 = vmatprep.subr.mxu0 0.0
    %91 = vmatpush1.msra.mxu0 0.0
    %92 = vmatprep.subr.mxu0 0.0
    %93 = vmatpush1.msra.mxu0 0.0
    %94 = vmatprep.subr.mxu0 0.0
    %95 = vmatpush1.msra.mxu0 0.0
    %96 = vmatprep.subr.mxu0 0.0
    %97 = vmatpush1.msra.mxu0 0.0
    %98 = vmatprep.subr.mxu0 0.0
    %99 = vmatpush1.msra.mxu0 0.0
    %100 = vmatprep.subr.mxu0 0.0
    %101 = vmatpush1.msra.mxu0 0.0
    %102 = vmatprep.subr.mxu0 0.0
    %103 = vmatpush1.msra.mxu0 0.0
    %104 = vmatprep.subr.mxu0 0.0
    %105 = vmatpush1.msra.mxu0 0.0
    %106 = vmatprep.subr.mxu0 0.0
    %107 = vmatpush1.msra.mxu0 0.0
    %108 = vmatprep.subr.mxu0 0.0
    %109 = vmatpush1.msra.mxu0 0.0
    %110 = vmatprep.subr.mxu0 0.0
    %111 = vmatpush1.msra.mxu0 0.0
    %112 = vmatprep.subr.mxu0 0.0
    %113 = vmatpush1.msra.mxu0 0.0
    %114 = vmatprep.subr.mxu0 0.0
    %115 = vmatpush1.msra.mxu0 0.0
    %116 = vmatprep.subr.mxu0 0.0
    %117 = vmatpush1.msra.mxu0 0.0
    %118 = vmatprep.subr.mxu0 0.0
    %119 = vmatpush1.msra.mxu0 0.0
    %120 = vmatprep.subr.mxu0 0.0
    %121 = vmatpush1.msra.mxu0 0.0
    %122 = vmatprep.subr.mxu0 0.0
    %123 = vmatpush1.msra.mxu0 0.0
    %124 = vmatprep.subr.mxu0 0.0
    %125 = vmatpush1.msra.mxu0 0.0
    %126 = vmatprep.mubr.f32.mxu0 0.0
    %127 = vmatmul.mubr.f32.gmra.mrb[0].mxu0 %v57
    %v128 = vpop.f32.mrb[0].mxu0
    %v129 = vadd.f32 0.0, %v128
    %v130 = vpop.f32.mrb[0].mxu0
    %131 = vmatprep.mubr.f32.mxu0 0.0
    %132 = vmatmul.mubr.f32.gmra.mrb[0].mxu0 %v60
    %v133 = vpop.f32.mrb[0].mxu0
    %v134 = vadd.f32 0.0, %v133
    %v135 = vpop.f32.mrb[0].mxu0
    %136 = vdwg.mxu0
    %139 = vrot.lane.b32.xlu0 %v129, 120
    %v140 = vpop.permute.xlu0 %139
    %141 = vrot.lane.b32.xlu0 %v134, 120
    %v142 = vpop.permute.xlu0 %141
    %145 = vrot.lane.b32.xlu0 %v129, 112
    %v146 = vpop.permute.xlu0 %145
    %147 = vrot.lane.b32.xlu0 %v134, 112
    %v148 = vpop.permute.xlu0 %147
    %151 = vrot.lane.b32.xlu0 %v129, 104
    %v152 = vpop.permute.xlu0 %151
    %153 = vrot.lane.b32.xlu0 %v134, 104
    %v154 = vpop.permute.xlu0 %153
    %v157 = vld [vmem:[%s3] sm:$0xff]
    %v158 = vld [vmem:[%s3 + $0x8] sm:$0xff]
    %v159 = vld [vmem:[%s3 + $0x10] sm:$0xff]
    %v160 = vld [vmem:[%s3 + $0x18] sm:$0xff]
    %v161 = vld [vmem:[%s3 + $0x20] sm:$0xff]
    %v162 = vld [vmem:[%s3 + $0x28] sm:$0xff]
    %v163 = vld [vmem:[%s3 + $0x30] sm:$0xff]
    %v164 = vld [vmem:[%s3 + $0x38] sm:$0xff]
    %v165 = vmul.f32 %v129, %v157
    %v166 = vmul.f32 %v134, %v158
    %v167 = vmul.f32 %v140, %v159
    %v168 = vmul.f32 %v142, %v160
    %v169 = vmul.f32 %v146, %v161
    %v170 = vmul.f32 %v148, %v162
    %v171 = vmul.f32 %v152, %v163
    %v172 = vmul.f32 %v154, %v164
    %181 = vrot.lane.b32.xlu0 %v165, 124
    %v182 = vpop.permute.xlu0 %181
    %183 = vrot.lane.b32.xlu0 %v166, 124
    %v184 = vpop.permute.xlu0 %183
    %185 = vrot.lane.b32.xlu0 %v167, 124
    %v186 = vpop.permute.xlu0 %185
    %187 = vrot.lane.b32.xlu0 %v168, 124
    %v188 = vpop.permute.xlu0 %187
    %189 = vrot.lane.b32.xlu0 %v169, 124
    %v190 = vpop.permute.xlu0 %189
    %191 = vrot.lane.b32.xlu0 %v170, 124
    %v192 = vpop.permute.xlu0 %191
    %193 = vrot.lane.b32.xlu0 %v171, 124
    %v194 = vpop.permute.xlu0 %193
    %195 = vrot.lane.b32.xlu0 %v172, 124
    %v196 = vpop.permute.xlu0 %195
    %v205 = vsub.f32 %v165, %v182
    %v206 = vsub.f32 %v166, %v184
    %v207 = vsub.f32 %v167, %v186
    %v208 = vsub.f32 %v168, %v188
    %v209 = vsub.f32 %v169, %v190
    %v210 = vsub.f32 %v170, %v192
    %v211 = vsub.f32 %v171, %v194
    %v212 = vsub.f32 %v172, %v196
    %221 = vrot.lane.b32.xlu0 %v157, 124
    %v222 = vpop.permute.xlu0 %221
    %223 = vrot.lane.b32.xlu0 %v158, 124
    %v224 = vpop.permute.xlu0 %223
    %225 = vrot.lane.b32.xlu0 %v159, 124
    %v226 = vpop.permute.xlu0 %225
    %227 = vrot.lane.b32.xlu0 %v160, 124
    %v228 = vpop.permute.xlu0 %227
    %229 = vrot.lane.b32.xlu0 %v161, 124
    %v230 = vpop.permute.xlu0 %229
    %231 = vrot.lane.b32.xlu0 %v162, 124
    %v232 = vpop.permute.xlu0 %231
    %233 = vrot.lane.b32.xlu0 %v163, 124
    %v234 = vpop.permute.xlu0 %233
    %235 = vrot.lane.b32.xlu0 %v164, 124
    %v236 = vpop.permute.xlu0 %235
    %v245 = vmul.f32 %v129, %v222
    %v246 = vmul.f32 %v134, %v224
    %v247 = vmul.f32 %v140, %v226
    %v248 = vmul.f32 %v142, %v228
    %v249 = vmul.f32 %v146, %v230
    %v250 = vmul.f32 %v148, %v232
    %v251 = vmul.f32 %v152, %v234
    %v252 = vmul.f32 %v154, %v236
    %253 = vrot.lane.b32.xlu0 %v157, 4
    %v254 = vpop.permute.xlu0 %253
    %255 = vrot.lane.b32.xlu0 %v158, 4
    %v256 = vpop.permute.xlu0 %255
    %257 = vrot.lane.b32.xlu0 %v159, 4
    %v258 = vpop.permute.xlu0 %257
    %259 = vrot.lane.b32.xlu0 %v160, 4
    %v260 = vpop.permute.xlu0 %259
    %261 = vrot.lane.b32.xlu0 %v161, 4
    %v262 = vpop.permute.xlu0 %261
    %263 = vrot.lane.b32.xlu0 %v162, 4
    %v264 = vpop.permute.xlu0 %263
    %265 = vrot.lane.b32.xlu0 %v163, 4
    %v266 = vpop.permute.xlu0 %265
    %267 = vrot.lane.b32.xlu0 %v164, 4
    %v268 = vpop.permute.xlu0 %267
    %v277 = vmul.f32 %v129, %v254
    %v278 = vmul.f32 %v134, %v256
    %v279 = vmul.f32 %v140, %v258
    %v280 = vmul.f32 %v142, %v260
    %v281 = vmul.f32 %v146, %v262
    %v282 = vmul.f32 %v148, %v264
    %v283 = vmul.f32 %v152, %v266
    %v284 = vmul.f32 %v154, %v268
    %293 = vrot.lane.b32.xlu0 %v277, 124
    %v294 = vpop.permute.xlu0 %293
    %295 = vrot.lane.b32.xlu0 %v278, 124
    %v296 = vpop.permute.xlu0 %295
    %297 = vrot.lane.b32.xlu0 %v279, 124
    %v298 = vpop.permute.xlu0 %297
    %299 = vrot.lane.b32.xlu0 %v280, 124
    %v300 = vpop.permute.xlu0 %299
    %301 = vrot.lane.b32.xlu0 %v281, 124
    %v302 = vpop.permute.xlu0 %301
    %303 = vrot.lane.b32.xlu0 %v282, 124
    %v304 = vpop.permute.xlu0 %303
    %305 = vrot.lane.b32.xlu0 %v283, 124
    %v306 = vpop.permute.xlu0 %305
    %307 = vrot.lane.b32.xlu0 %v284, 124
    %v308 = vpop.permute.xlu0 %307
    %v317 = vadd.f32 %v245, %v294
    %v318 = vadd.f32 %v246, %v296
    %v319 = vadd.f32 %v247, %v298
    %v320 = vadd.f32 %v248, %v300
    %v321 = vadd.f32 %v249, %v302
    %v322 = vadd.f32 %v250, %v304
    %v323 = vadd.f32 %v251, %v306
    %v324 = vadd.f32 %v252, %v308
    %333 = vrot.lane.b32.xlu0 %v317, 4
    %v334 = vpop.permute.xlu0 %333
    %335 = vrot.lane.b32.xlu0 %v318, 4
    %v336 = vpop.permute.xlu0 %335
    %337 = vrot.lane.b32.xlu0 %v319, 4
    %v338 = vpop.permute.xlu0 %337
    %339 = vrot.lane.b32.xlu0 %v320, 4
    %v340 = vpop.permute.xlu0 %339
    %341 = vrot.lane.b32.xlu0 %v321, 4
    %v342 = vpop.permute.xlu0 %341
    %343 = vrot.lane.b32.xlu0 %v322, 4
    %v344 = vpop.permute.xlu0 %343
    %345 = vrot.lane.b32.xlu0 %v323, 4
    %v346 = vpop.permute.xlu0 %345
    %347 = vrot.lane.b32.xlu0 %v324, 4
    %v348 = vpop.permute.xlu0 %347
    %vm357 = vcmask 31744
    %v358 = vsel %vm357, %v205, %v334
    %v359 = vsel %vm357, %v206, %v336
    %v360 = vsel %vm357, %v207, %v338
    %v361 = vsel %vm357, %v208, %v340
    %v362 = vsel %vm357, %v209, %v342
    %v363 = vsel %vm357, %v210, %v344
    %v364 = vsel %vm357, %v211, %v346
    %v365 = vsel %vm357, %v212, %v348
    %366 = vrot.lane.b32.xlu0 %v157, 32
    %v367 = vpop.permute.xlu0 %366
    %368 = vrot.lane.b32.xlu0 %v158, 32
    %v369 = vpop.permute.xlu0 %368
    %370 = vrot.lane.b32.xlu0 %v159, 32
    %v371 = vpop.permute.xlu0 %370
    %372 = vrot.lane.b32.xlu0 %v160, 32
    %v373 = vpop.permute.xlu0 %372
    %374 = vrot.lane.b32.xlu0 %v161, 32
    %v375 = vpop.permute.xlu0 %374
    %376 = vrot.lane.b32.xlu0 %v162, 32
    %v377 = vpop.permute.xlu0 %376
    %378 = vrot.lane.b32.xlu0 %v163, 32
    %v379 = vpop.permute.xlu0 %378
    %380 = vrot.lane.b32.xlu0 %v164, 32
    %v381 = vpop.permute.xlu0 %380
    %v390 = vmul.f32 %v129, %v367
    %v391 = vmul.f32 %v134, %v369
    %v392 = vmul.f32 %v129, %v371
    %v393 = vmul.f32 %v134, %v373
    %v394 = vmul.f32 %v140, %v375
    %v395 = vmul.f32 %v142, %v377
    %v396 = vmul.f32 %v140, %v379
    %v397 = vmul.f32 %v142, %v381
    %406 = vrot.lane.b32.xlu0 %v390, 124
    %v407 = vpop.permute.xlu0 %406
    %408 = vrot.lane.b32.xlu0 %v391, 124
    %v409 = vpop.permute.xlu0 %408
    %410 = vrot.lane.b32.xlu0 %v392, 124
    %v411 = vpop.permute.xlu0 %410
    %412 = vrot.lane.b32.xlu0 %v393, 124
    %v413 = vpop.permute.xlu0 %412
    %414 = vrot.lane.b32.xlu0 %v394, 124
    %v415 = vpop.permute.xlu0 %414
    %416 = vrot.lane.b32.xlu0 %v395, 124
    %v417 = vpop.permute.xlu0 %416
    %418 = vrot.lane.b32.xlu0 %v396, 124
    %v419 = vpop.permute.xlu0 %418
    %420 = vrot.lane.b32.xlu0 %v397, 124
    %v421 = vpop.permute.xlu0 %420
    %v430 = vsub.f32 %v390, %v407
    %v431 = vsub.f32 %v391, %v409
    %v432 = vsub.f32 %v392, %v411
    %v433 = vsub.f32 %v393, %v413
    %v434 = vsub.f32 %v394, %v415
    %v435 = vsub.f32 %v395, %v417
    %v436 = vsub.f32 %v396, %v419
    %v437 = vsub.f32 %v397, %v421
    %438 = vrot.lane.b32.xlu0 %v157, 28
    %v439 = vpop.permute.xlu0 %438
    %440 = vrot.lane.b32.xlu0 %v158, 28
    %v441 = vpop.permute.xlu0 %440
    %442 = vrot.lane.b32.xlu0 %v159, 28
    %v443 = vpop.permute.xlu0 %442
    %444 = vrot.lane.b32.xlu0 %v160, 28
    %v445 = vpop.permute.xlu0 %444
    %446 = vrot.lane.b32.xlu0 %v161, 28
    %v447 = vpop.permute.xlu0 %446
    %448 = vrot.lane.b32.xlu0 %v162, 28
    %v449 = vpop.permute.xlu0 %448
    %450 = vrot.lane.b32.xlu0 %v163, 28
    %v451 = vpop.permute.xlu0 %450
    %452 = vrot.lane.b32.xlu0 %v164, 28
    %v453 = vpop.permute.xlu0 %452
    %v462 = vmul.f32 %v129, %v439
    %v463 = vmul.f32 %v134, %v441
    %v464 = vmul.f32 %v129, %v443
    %v465 = vmul.f32 %v134, %v445
    %v466 = vmul.f32 %v140, %v447
    %v467 = vmul.f32 %v142, %v449
    %v468 = vmul.f32 %v140, %v451
    %v469 = vmul.f32 %v142, %v453
    %470 = vrot.lane.b32.xlu0 %v157, 36
    %v471 = vpop.permute.xlu0 %470
    %472 = vrot.lane.b32.xlu0 %v158, 36
    %v473 = vpop.permute.xlu0 %472
    %474 = vrot.lane.b32.xlu0 %v159, 36
    %v475 = vpop.permute.xlu0 %474
    %476 = vrot.lane.b32.xlu0 %v160, 36
    %v477 = vpop.permute.xlu0 %476
    %478 = vrot.lane.b32.xlu0 %v161, 36
    %v479 = vpop.permute.xlu0 %478
    %480 = vrot.lane.b32.xlu0 %v162, 36
    %v481 = vpop.permute.xlu0 %480
    %482 = vrot.lane.b32.xlu0 %v163, 36
    %v483 = vpop.permute.xlu0 %482
    %484 = vrot.lane.b32.xlu0 %v164, 36
    %v485 = vpop.permute.xlu0 %484
    %v494 = vmul.f32 %v129, %v471
    %v495 = vmul.f32 %v134, %v473
    %v496 = vmul.f32 %v129, %v475
    %v497 = vmul.f32 %v134, %v477
    %v498 = vmul.f32 %v140, %v479
    %v499 = vmul.f32 %v142, %v481
    %v500 = vmul.f32 %v140, %v483
    %v501 = vmul.f32 %v142, %v485
    %510 = vrot.lane.b32.xlu0 %v494, 124
    %v511 = vpop.permute.xlu0 %510
    %512 = vrot.lane.b32.xlu0 %v495, 124
    %v513 = vpop.permute.xlu0 %512
    %514 = vrot.lane.b32.xlu0 %v496, 124
    %v515 = vpop.permute.xlu0 %514
    %516 = vrot.lane.b32.xlu0 %v497, 124
    %v517 = vpop.permute.xlu0 %516
    %518 = vrot.lane.b32.xlu0 %v498, 124
    %v519 = vpop.permute.xlu0 %518
    %520 = vrot.lane.b32.xlu0 %v499, 124
    %v521 = vpop.permute.xlu0 %520
    %522 = vrot.lane.b32.xlu0 %v500, 124
    %v523 = vpop.permute.xlu0 %522
    %524 = vrot.lane.b32.xlu0 %v501, 124
    %v525 = vpop.permute.xlu0 %524
    %v534 = vadd.f32 %v462, %v511
    %v535 = vadd.f32 %v463, %v513
    %v536 = vadd.f32 %v464, %v515
    %v537 = vadd.f32 %v465, %v517
    %v538 = vadd.f32 %v466, %v519
    %v539 = vadd.f32 %v467, %v521
    %v540 = vadd.f32 %v468, %v523
    %v541 = vadd.f32 %v469, %v525
    %550 = vrot.lane.b32.xlu0 %v430, 96
    %v551 = vpop.permute.xlu0 %550
    %552 = vrot.lane.b32.xlu0 %v431, 96
    %v553 = vpop.permute.xlu0 %552
    %554 = vrot.lane.b32.xlu0 %v432, 96
    %v555 = vpop.permute.xlu0 %554
    %556 = vrot.lane.b32.xlu0 %v433, 96
    %v557 = vpop.permute.xlu0 %556
    %558 = vrot.lane.b32.xlu0 %v434, 96
    %v559 = vpop.permute.xlu0 %558
    %560 = vrot.lane.b32.xlu0 %v435, 96
    %v561 = vpop.permute.xlu0 %560
    %562 = vrot.lane.b32.xlu0 %v436, 96
    %v563 = vpop.permute.xlu0 %562
    %564 = vrot.lane.b32.xlu0 %v437, 96
    %v565 = vpop.permute.xlu0 %564
    %582 = vrot.lane.b32.xlu0 %v534, 100
    %v583 = vpop.permute.xlu0 %582
    %584 = vrot.lane.b32.xlu0 %v535, 100
    %v585 = vpop.permute.xlu0 %584
    %586 = vrot.lane.b32.xlu0 %v536, 100
    %v587 = vpop.permute.xlu0 %586
    %588 = vrot.lane.b32.xlu0 %v537, 100
    %v589 = vpop.permute.xlu0 %588
    %590 = vrot.lane.b32.xlu0 %v538, 100
    %v591 = vpop.permute.xlu0 %590
    %592 = vrot.lane.b32.xlu0 %v539, 100
    %v593 = vpop.permute.xlu0 %592
    %594 = vrot.lane.b32.xlu0 %v540, 100
    %v595 = vpop.permute.xlu0 %594
    %596 = vrot.lane.b32.xlu0 %v541, 100
    %v597 = vpop.permute.xlu0 %596
    %v606 = vsel %vm357, %v551, %v583
    %v607 = vsel %vm357, %v553, %v585
    %v608 = vsel %vm357, %v555, %v587
    %v609 = vsel %vm357, %v557, %v589
    %v610 = vsel %vm357, %v559, %v591
    %v611 = vsel %vm357, %v561, %v593
    %v612 = vsel %vm357, %v563, %v595
    %v613 = vsel %vm357, %v565, %v597
    %v614 = vld [vmem:[%s4] sm:$0xff]
    %v615 = vld [vmem:[%s4 + $0x8] sm:$0xff]
    %v616 = vld [vmem:[%s4 + $0x10] sm:$0xff]
    %v617 = vld [vmem:[%s4 + $0x18] sm:$0xff]
    %v618 = vld [vmem:[%s4 + $0x20] sm:$0xff]
    %v619 = vld [vmem:[%s4 + $0x28] sm:$0xff]
    %v620 = vld [vmem:[%s4 + $0x30] sm:$0xff]
    %v621 = vld [vmem:[%s4 + $0x38] sm:$0xff]
    %vm622 = vcmask 64512
    %v624 = vsel %vm622, %v358, 0
    %v627 = vsel %vm622, %v359, 0
    %v630 = vsel %vm622, %v360, 0
    %v633 = vsel %vm622, %v361, 0
    %v636 = vsel %vm622, %v362, 0
    %v639 = vsel %vm622, %v363, 0
    %v642 = vsel %vm622, %v364, 0
    %v645 = vsel %vm622, %v365, 0
    %v648 = vsel %vm622, %v606, 0
    %v651 = vsel %vm622, %v607, 0
    %v654 = vsel %vm622, %v608, 0
    %v657 = vsel %vm622, %v609, 0
    %v660 = vsel %vm622, %v610, 0
    %v663 = vsel %vm622, %v611, 0
    %v666 = vsel %vm622, %v612, 0
    %v669 = vsel %vm622, %v613, 0
    %671 = vmatprep.subr.mxu0 0.0
    %672 = vmatpush1.xpose.msra.mxu0 %v648
    %673 = vmatprep.subr.mxu0 0.0
    %674 = vmatpush1.xpose.msra.mxu0 %v651
    %675 = vmatprep.subr.mxu0 0.0
    %676 = vmatpush1.xpose.msra.mxu0 %v654
    %677 = vmatprep.subr.mxu0 0.0
    %678 = vmatpush1.xpose.msra.mxu0 %v657
    %679 = vmatprep.subr.mxu0 0.0
    %680 = vmatpush1.xpose.msra.mxu0 %v660
    %681 = vmatprep.subr.mxu0 0.0
    %682 = vmatpush1.xpose.msra.mxu0 %v663
    %683 = vmatprep.subr.mxu0 0.0
    %684 = vmatpush1.xpose.msra.mxu0 %v666
    %685 = vmatprep.subr.mxu0 0.0
    %686 = vmatpush1.xpose.msra.mxu0 %v669
    %687 = vmatprep.subr.mxu0 0.0
    %688 = vmatpush1.xpose.msra.mxu0 0.0
    %689 = vmatprep.subr.mxu0 0.0
    %690 = vmatpush1.xpose.msra.mxu0 0.0
    %691 = vmatprep.subr.mxu0 0.0
    %692 = vmatpush1.xpose.msra.mxu0 0.0
    %693 = vmatprep.subr.mxu0 0.0
    %694 = vmatpush1.xpose.msra.mxu0 0.0
    %695 = vmatprep.subr.mxu0 0.0
    %696 = vmatpush1.xpose.msra.mxu0 0.0
    %697 = vmatprep.subr.mxu0 0.0
    %698 = vmatpush1.xpose.msra.mxu0 0.0
    %699 = vmatprep.subr.mxu0 0.0
    %700 = vmatpush1.xpose.msra.mxu0 0.0
    %701 = vmatprep.subr.mxu0 0.0
    %702 = vmatpush1.xpose.msra.mxu0 0.0
    %703 = vmatprep.subr.mxu0 0.0
    %704 = vmatpush1.xpose.msra.mxu0 0.0
    %705 = vmatprep.subr.mxu0 0.0
    %706 = vmatpush1.xpose.msra.mxu0 0.0
    %707 = vmatprep.subr.mxu0 0.0
    %708 = vmatpush1.xpose.msra.mxu0 0.0
    %709 = vmatprep.subr.mxu0 0.0
    %710 = vmatpush1.xpose.msra.mxu0 0.0
    %711 = vmatprep.subr.mxu0 0.0
    %712 = vmatpush1.xpose.msra.mxu0 0.0
    %713 = vmatprep.subr.mxu0 0.0
    %714 = vmatpush1.xpose.msra.mxu0 0.0
    %715 = vmatprep.subr.mxu0 0.0
    %716 = vmatpush1.xpose.msra.mxu0 0.0
    %717 = vmatprep.subr.mxu0 0.0
    %718 = vmatpush1.xpose.msra.mxu0 0.0
    %719 = vmatprep.subr.mxu0 0.0
    %720 = vmatpush1.xpose.msra.mxu0 0.0
    %721 = vmatprep.subr.mxu0 0.0
    %722 = vmatpush1.xpose.msra.mxu0 0.0
    %723 = vmatprep.subr.mxu0 0.0
    %724 = vmatpush1.xpose.msra.mxu0 0.0
    %725 = vmatprep.subr.mxu0 0.0
    %726 = vmatpush1.xpose.msra.mxu0 0.0
    %727 = vmatprep.subr.mxu0 0.0
    %728 = vmatpush1.xpose.msra.mxu0 0.0
    %729 = vmatprep.subr.mxu0 0.0
    %730 = vmatpush1.xpose.msra.mxu0 0.0
    %731 = vmatprep.subr.mxu0 0.0
    %732 = vmatpush1.xpose.msra.mxu0 0.0
    %733 = vmatprep.subr.mxu0 0.0
    %734 = vmatpush1.xpose.msra.mxu0 0.0
    %735 = vmatprep.mubr.f32.mxu0 0.0
    %736 = vmatmul.mubr.f32.gmra.mrb[0].mxu0 %v624
    %v737 = vpop.f32.mrb[0].mxu0
    %v738 = vadd.f32 %v614, %v737
    %v739 = vpop.f32.mrb[0].mxu0
    %740 = vmatprep.mubr.f32.mxu0 0.0
    %741 = vmatmul.mubr.f32.gmra.mrb[0].mxu0 %v627
    %v742 = vpop.f32.mrb[0].mxu0
    %v743 = vadd.f32 %v615, %v742
    %v744 = vpop.f32.mrb[0].mxu0
    %745 = vmatprep.mubr.f32.mxu0 0.0
    %746 = vmatmul.mubr.f32.gmra.mrb[0].mxu0 %v630
    %v747 = vpop.f32.mrb[0].mxu0
    %v748 = vadd.f32 %v616, %v747
    %v749 = vpop.f32.mrb[0].mxu0
    %750 = vmatprep.mubr.f32.mxu0 0.0
    %751 = vmatmul.mubr.f32.gmra.mrb[0].mxu0 %v633
    %v752 = vpop.f32.mrb[0].mxu0
    %v753 = vadd.f32 %v617, %v752
    %v754 = vpop.f32.mrb[0].mxu0
    %755 = vmatprep.mubr.f32.mxu0 0.0
    %756 = vmatmul.mubr.f32.gmra.mrb[0].mxu0 %v636
    %v757 = vpop.f32.mrb[0].mxu0
    %v758 = vadd.f32 %v618, %v757
    %v759 = vpop.f32.mrb[0].mxu0
    %760 = vmatprep.mubr.f32.mxu0 0.0
    %761 = vmatmul.mubr.f32.gmra.mrb[0].mxu0 %v639
    %v762 = vpop.f32.mrb[0].mxu0
    %v763 = vadd.f32 %v619, %v762
    %v764 = vpop.f32.mrb[0].mxu0
    %765 = vmatprep.mubr.f32.mxu0 0.0
    %766 = vmatmul.mubr.f32.gmra.mrb[0].mxu0 %v642
    %v767 = vpop.f32.mrb[0].mxu0
    %v768 = vadd.f32 %v620, %v767
    %v769 = vpop.f32.mrb[0].mxu0
    %770 = vmatprep.mubr.f32.mxu0 0.0
    %771 = vmatmul.mubr.f32.gmra.mrb[0].mxu0 %v645
    %v772 = vpop.f32.mrb[0].mxu0
    %v773 = vadd.f32 %v621, %v772
    %v774 = vpop.f32.mrb[0].mxu0
    %775 = vdwg.mxu0
    %vm776 = vcmask 523264
    %v777 = vsel %vm776, %v738, -inf
    %778 = vmax.xlane.f32.xlu0 %v777
    %v779 = vpop.xlane.xlu0 %778
    %v780 = vsel %vm776, %v743, -inf
    %781 = vmax.xlane.f32.xlu0 %v780
    %v782 = vpop.xlane.xlu0 %781
    %v783 = vsel %vm776, %v748, -inf
    %784 = vmax.xlane.f32.xlu0 %v783
    %v785 = vpop.xlane.xlu0 %784
    %v786 = vsel %vm776, %v753, -inf
    %787 = vmax.xlane.f32.xlu0 %v786
    %v788 = vpop.xlane.xlu0 %787
    %v789 = vsel %vm776, %v758, -inf
    %790 = vmax.xlane.f32.xlu0 %v789
    %v791 = vpop.xlane.xlu0 %790
    %v792 = vsel %vm776, %v763, -inf
    %793 = vmax.xlane.f32.xlu0 %v792
    %v794 = vpop.xlane.xlu0 %793
    %v795 = vsel %vm776, %v768, -inf
    %796 = vmax.xlane.f32.xlu0 %v795
    %v797 = vpop.xlane.xlu0 %796
    %v798 = vsel %vm776, %v773, -inf
    %799 = vmax.xlane.f32.xlu0 %v798
    %v800 = vpop.xlane.xlu0 %799
    %v801 = vsub.f32 %v738, %v779
    %v802 = vsub.f32 %v743, %v782
    %v803 = vsub.f32 %v748, %v785
    %v804 = vsub.f32 %v753, %v788
    %v805 = vsub.f32 %v758, %v791
    %v806 = vsub.f32 %v763, %v794
    %v807 = vsub.f32 %v768, %v797
    %v808 = vsub.f32 %v773, %v800
    %v809 = vmul.f32 %v801, 1.442695
    %v810 = vpow.pop %v809
    %v811 = vmul.f32 %v802, 1.442695
    %v812 = vpow.pop %v811
    %v813 = vmul.f32 %v803, 1.442695
    %v814 = vpow.pop %v813
    %v815 = vmul.f32 %v804, 1.442695
    %v816 = vpow.pop %v815
    %v817 = vmul.f32 %v805, 1.442695
    %v818 = vpow.pop %v817
    %v819 = vmul.f32 %v806, 1.442695
    %v820 = vpow.pop %v819
    %v821 = vmul.f32 %v807, 1.442695
    %v822 = vpow.pop %v821
    %v823 = vmul.f32 %v808, 1.442695
    %v824 = vpow.pop %v823
    %v825 = vsel %vm776, %v810, 0.0
    %826 = vadd.xlane.f32.xlu0 %v825
    %v827 = vpop.xlane.xlu0 %826
    %v828 = vsel %vm776, %v812, 0.0
    %829 = vadd.xlane.f32.xlu0 %v828
    %v830 = vpop.xlane.xlu0 %829
    %v831 = vsel %vm776, %v814, 0.0
    %832 = vadd.xlane.f32.xlu0 %v831
    %v833 = vpop.xlane.xlu0 %832
    %v834 = vsel %vm776, %v816, 0.0
    %835 = vadd.xlane.f32.xlu0 %v834
    %v836 = vpop.xlane.xlu0 %835
    %v837 = vsel %vm776, %v818, 0.0
    %838 = vadd.xlane.f32.xlu0 %v837
    %v839 = vpop.xlane.xlu0 %838
    %v840 = vsel %vm776, %v820, 0.0
    %841 = vadd.xlane.f32.xlu0 %v840
    %v842 = vpop.xlane.xlu0 %841
    %v843 = vsel %vm776, %v822, 0.0
    %844 = vadd.xlane.f32.xlu0 %v843
    %v845 = vpop.xlane.xlu0 %844
    %v846 = vsel %vm776, %v824, 0.0
    %847 = vadd.xlane.f32.xlu0 %v846
    %v848 = vpop.xlane.xlu0 %847
    %v849 = vrcp.pop %v827
    %v850 = vrcp.pop %v830
    %v851 = vrcp.pop %v833
    %v852 = vrcp.pop %v836
    %v853 = vrcp.pop %v839
    %v854 = vrcp.pop %v842
    %v855 = vrcp.pop %v845
    %v856 = vrcp.pop %v848
    %v857 = vmul.f32 %v810, %v849
    %v858 = vmul.f32 %v812, %v850
    %v859 = vmul.f32 %v814, %v851
    %v860 = vmul.f32 %v816, %v852
    %v861 = vmul.f32 %v818, %v853
    %v862 = vmul.f32 %v820, %v854
    %v863 = vmul.f32 %v822, %v855
    %v864 = vmul.f32 %v824, %v856
    %865 = vrot.lane.b32.xlu0 %v129, 80
    %v866 = vpop.permute.xlu0 %865
    %867 = vrot.lane.b32.xlu0 %v134, 80
    %v868 = vpop.permute.xlu0 %867
    %869 = vrot.lane.b32.xlu0 %v140, 80
    %v870 = vpop.permute.xlu0 %869
    %871 = vrot.lane.b32.xlu0 %v142, 80
    %v872 = vpop.permute.xlu0 %871
    %v878 = vsel %vm776, %v857, 0
    %v881 = vsel %vm776, %v858, 0
    %v884 = vsel %vm776, %v859, 0
    %v887 = vsel %vm776, %v860, 0
    %v890 = vsel %vm776, %v861, 0
    %v893 = vsel %vm776, %v862, 0
    %v896 = vsel %vm776, %v863, 0
    %v899 = vsel %vm776, %v864, 0
    %901 = vmatprep.subr.mxu0 0.0
    %902 = vmatpush1.msra.mxu0 %v866
    %903 = vmatprep.subr.mxu0 0.0
    %904 = vmatpush1.msra.mxu0 %v868
    %905 = vmatprep.subr.mxu0 0.0
    %906 = vmatpush1.msra.mxu0 %v866
    %907 = vmatprep.subr.mxu0 0.0
    %908 = vmatpush1.msra.mxu0 %v868
    %909 = vmatprep.subr.mxu0 0.0
    %910 = vmatpush1.msra.mxu0 %v870
    %911 = vmatprep.subr.mxu0 0.0
    %912 = vmatpush1.msra.mxu0 %v872
    %913 = vmatprep.subr.mxu0 0.0
    %914 = vmatpush1.msra.mxu0 %v870
    %915 = vmatprep.subr.mxu0 0.0
    %916 = vmatpush1.msra.mxu0 %v872
    %917 = vmatprep.subr.mxu0 0.0
    %918 = vmatpush1.msra.mxu0 0.0
    %919 = vmatprep.subr.mxu0 0.0
    %920 = vmatpush1.msra.mxu0 0.0
    %921 = vmatprep.subr.mxu0 0.0
    %922 = vmatpush1.msra.mxu0 0.0
    %923 = vmatprep.subr.mxu0 0.0
    %924 = vmatpush1.msra.mxu0 0.0
    %925 = vmatprep.subr.mxu0 0.0
    %926 = vmatpush1.msra.mxu0 0.0
    %927 = vmatprep.subr.mxu0 0.0
    %928 = vmatpush1.msra.mxu0 0.0
    %929 = vmatprep.subr.mxu0 0.0
    %930 = vmatpush1.msra.mxu0 0.0
    %931 = vmatprep.subr.mxu0 0.0
    %932 = vmatpush1.msra.mxu0 0.0
    %933 = vmatprep.subr.mxu0 0.0
    %934 = vmatpush1.msra.mxu0 0.0
    %935 = vmatprep.subr.mxu0 0.0
    %936 = vmatpush1.msra.mxu0 0.0
    %937 = vmatprep.subr.mxu0 0.0
    %938 = vmatpush1.msra.mxu0 0.0
    %939 = vmatprep.subr.mxu0 0.0
    %940 = vmatpush1.msra.mxu0 0.0
    %941 = vmatprep.subr.mxu0 0.0
    %942 = vmatpush1.msra.mxu0 0.0
    %943 = vmatprep.subr.mxu0 0.0
    %944 = vmatpush1.msra.mxu0 0.0
    %945 = vmatprep.subr.mxu0 0.0
    %946 = vmatpush1.msra.mxu0 0.0
    %947 = vmatprep.subr.mxu0 0.0
    %948 = vmatpush1.msra.mxu0 0.0
    %949 = vmatprep.subr.mxu0 0.0
    %950 = vmatpush1.msra.mxu0 0.0
    %951 = vmatprep.subr.mxu0 0.0
    %952 = vmatpush1.msra.mxu0 0.0
    %953 = vmatprep.subr.mxu0 0.0
    %954 = vmatpush1.msra.mxu0 0.0
    %955 = vmatprep.subr.mxu0 0.0
    %956 = vmatpush1.msra.mxu0 0.0
    %957 = vmatprep.subr.mxu0 0.0
    %958 = vmatpush1.msra.mxu0 0.0
    %959 = vmatprep.subr.mxu0 0.0
    %960 = vmatpush1.msra.mxu0 0.0
    %961 = vmatprep.subr.mxu0 0.0
    %962 = vmatpush1.msra.mxu0 0.0
    %963 = vmatprep.subr.mxu0 0.0
    %964 = vmatpush1.msra.mxu0 0.0
    %965 = vmatprep.mubr.f32.mxu0 0.0
    %966 = vmatmul.mubr.f32.gmra.mrb[0].mxu0 %v878
    %v967 = vpop.f32.mrb[0].mxu0
    %v968 = vadd.f32 0.0, %v967
    %v969 = vpop.f32.mrb[0].mxu0
    %970 = vmatprep.mubr.f32.mxu0 0.0
    %971 = vmatmul.mubr.f32.gmra.mrb[0].mxu0 %v881
    %v972 = vpop.f32.mrb[0].mxu0
    %v973 = vadd.f32 0.0, %v972
    %v974 = vpop.f32.mrb[0].mxu0
    %975 = vmatprep.mubr.f32.mxu0 0.0
    %976 = vmatmul.mubr.f32.gmra.mrb[0].mxu0 %v884
    %v977 = vpop.f32.mrb[0].mxu0
    %v978 = vadd.f32 0.0, %v977
    %v979 = vpop.f32.mrb[0].mxu0
    %980 = vmatprep.mubr.f32.mxu0 0.0
    %981 = vmatmul.mubr.f32.gmra.mrb[0].mxu0 %v887
    %v982 = vpop.f32.mrb[0].mxu0
    %v983 = vadd.f32 0.0, %v982
    %v984 = vpop.f32.mrb[0].mxu0
    %985 = vmatprep.mubr.f32.mxu0 0.0
    %986 = vmatmul.mubr.f32.gmra.mrb[0].mxu0 %v890
    %v987 = vpop.f32.mrb[0].mxu0
    %v988 = vadd.f32 0.0, %v987
    %v989 = vpop.f32.mrb[0].mxu0
    %990 = vmatprep.mubr.f32.mxu0 0.0
    %991 = vmatmul.mubr.f32.gmra.mrb[0].mxu0 %v893
    %v992 = vpop.f32.mrb[0].mxu0
    %v993 = vadd.f32 0.0, %v992
    %v994 = vpop.f32.mrb[0].mxu0
    %995 = vmatprep.mubr.f32.mxu0 0.0
    %996 = vmatmul.mubr.f32.gmra.mrb[0].mxu0 %v896
    %v997 = vpop.f32.mrb[0].mxu0
    %v998 = vadd.f32 0.0, %v997
    %v999 = vpop.f32.mrb[0].mxu0
    %1000 = vmatprep.mubr.f32.mxu0 0.0
    %1001 = vmatmul.mubr.f32.gmra.mrb[0].mxu0 %v899
    %v1002 = vpop.f32.mrb[0].mxu0
    %v1003 = vadd.f32 0.0, %v1002
    %v1004 = vpop.f32.mrb[0].mxu0
    %1005 = vdwg.mxu0
    %1008 = vrot.lane.b32.xlu0 %v978, 8
    %v1009 = vpop.permute.xlu0 %1008
    %1010 = vrot.lane.b32.xlu0 %v983, 8
    %v1011 = vpop.permute.xlu0 %1010
    %1016 = vrot.lane.b32.xlu0 %v988, 16
    %v1017 = vpop.permute.xlu0 %1016
    %1018 = vrot.lane.b32.xlu0 %v993, 16
    %v1019 = vpop.permute.xlu0 %1018
    %1024 = vrot.lane.b32.xlu0 %v998, 24
    %v1025 = vpop.permute.xlu0 %1024
    %1026 = vrot.lane.b32.xlu0 %v1003, 24
    %v1027 = vpop.permute.xlu0 %1026
    %v1030 = vsel %vm622, %v968, %v1009
    %v1031 = vsel %vm622, %v973, %v1011
    %vm1032 = vcmask 130048
    %v1033 = vsel %vm1032, %v1030, %v1017
    %v1034 = vsel %vm1032, %v1031, %v1019
    %vm1035 = vcmask 195584
    %v1036 = vsel %vm1035, %v1033, %v1025
    %v1037 = vsel %vm1035, %v1034, %v1027
    %v1038 = vld [vmem:[#allocation5] sm:$0xff]
    %v1039 = vld [vmem:[#allocation5 + $0x8] sm:$0xff]
    %v1040 = vld [vmem:[#allocation5 + $0x10] sm:$0xff]
    %v1041 = vld [vmem:[#allocation5 + $0x18] sm:$0xff]
    %v1043 = vsel %vm55, %v1036, 0
    %v1046 = vsel %vm55, %v1037, 0
    %1048 = vmatprep.subr.mxu0 0.0
    %1049 = vmatpush1.msra.mxu0 %v1038
    %1050 = vmatprep.subr.mxu0 0.0
    %1051 = vmatpush1.msra.mxu0 %v1039
    %1052 = vmatprep.subr.mxu0 0.0
    %1053 = vmatpush1.msra.mxu0 %v1040
    %1054 = vmatprep.subr.mxu0 0.0
    %1055 = vmatpush1.msra.mxu0 %v1041
    %1056 = vmatprep.subr.mxu0 0.0
    %1057 = vmatpush1.msra.mxu0 0.0
    %1058 = vmatprep.subr.mxu0 0.0
    %1059 = vmatpush1.msra.mxu0 0.0
    %1060 = vmatprep.subr.mxu0 0.0
    %1061 = vmatpush1.msra.mxu0 0.0
    %1062 = vmatprep.subr.mxu0 0.0
    %1063 = vmatpush1.msra.mxu0 0.0
    %1064 = vmatprep.subr.mxu0 0.0
    %1065 = vmatpush1.msra.mxu0 0.0
    %1066 = vmatprep.subr.mxu0 0.0
    %1067 = vmatpush1.msra.mxu0 0.0
    %1068 = vmatprep.subr.mxu0 0.0
    %1069 = vmatpush1.msra.mxu0 0.0
    %1070 = vmatprep.subr.mxu0 0.0
    %1071 = vmatpush1.msra.mxu0 0.0
    %1072 = vmatprep.subr.mxu0 0.0
    %1073 = vmatpush1.msra.mxu0 0.0
    %1074 = vmatprep.subr.mxu0 0.0
    %1075 = vmatpush1.msra.mxu0 0.0
    %1076 = vmatprep.subr.mxu0 0.0
    %1077 = vmatpush1.msra.mxu0 0.0
    %1078 = vmatprep.subr.mxu0 0.0
    %1079 = vmatpush1.msra.mxu0 0.0
    %1080 = vmatprep.subr.mxu0 0.0
    %1081 = vmatpush1.msra.mxu0 0.0
    %1082 = vmatprep.subr.mxu0 0.0
    %1083 = vmatpush1.msra.mxu0 0.0
    %1084 = vmatprep.subr.mxu0 0.0
    %1085 = vmatpush1.msra.mxu0 0.0
    %1086 = vmatprep.subr.mxu0 0.0
    %1087 = vmatpush1.msra.mxu0 0.0
    %1088 = vmatprep.subr.mxu0 0.0
    %1089 = vmatpush1.msra.mxu0 0.0
    %1090 = vmatprep.subr.mxu0 0.0
    %1091 = vmatpush1.msra.mxu0 0.0
    %1092 = vmatprep.subr.mxu0 0.0
    %1093 = vmatpush1.msra.mxu0 0.0
    %1094 = vmatprep.subr.mxu0 0.0
    %1095 = vmatpush1.msra.mxu0 0.0
    %1096 = vmatprep.subr.mxu0 0.0
    %1097 = vmatpush1.msra.mxu0 0.0
    %1098 = vmatprep.subr.mxu0 0.0
    %1099 = vmatpush1.msra.mxu0 0.0
    %1100 = vmatprep.subr.mxu0 0.0
    %1101 = vmatpush1.msra.mxu0 0.0
    %1102 = vmatprep.subr.mxu0 0.0
    %1103 = vmatpush1.msra.mxu0 0.0
    %1104 = vmatprep.subr.mxu0 0.0
    %1105 = vmatpush1.msra.mxu0 0.0
    %1106 = vmatprep.subr.mxu0 0.0
    %1107 = vmatpush1.msra.mxu0 0.0
    %1108 = vmatprep.subr.mxu0 0.0
    %1109 = vmatpush1.msra.mxu0 0.0
    %1110 = vmatprep.subr.mxu0 0.0
    %1111 = vmatpush1.msra.mxu0 0.0
    %1112 = vmatprep.mubr.f32.mxu0 0.0
    %1113 = vmatmul.mubr.f32.gmra.mrb[0].mxu0 %v1043
    %v1114 = vpop.f32.mrb[0].mxu0
    %v1115 = vadd.f32 0.0, %v1114
    %v1116 = vpop.f32.mrb[0].mxu0
    %1117 = vmatprep.mubr.f32.mxu0 0.0
    %1118 = vmatmul.mubr.f32.gmra.mrb[0].mxu0 %v1046
    %v1119 = vpop.f32.mrb[0].mxu0
    %v1120 = vadd.f32 0.0, %v1119
    %v1121 = vpop.f32.mrb[0].mxu0
    %1122 = vdwg.mxu0
    %1123 = vst.msk [vmem:[#allocation7] sm:$0xff] %vm55, %v1115
    %1124 = vst.msk [vmem:[#allocation7 + $0x8] sm:$0xff] %vm55, %v1120
    // Predicated region
    $region30: #{demo_attention.1} parent=1 // pred_check
      _
    $region31: #{demo_attention.1} parent=1 // pred_check_branch
      %1126 = sbr.rel (0) target = $region33
    $region32: #{demo_attention.1} parent=1 // pred_region
      %s1128 = ssub.s32 256, 256
      %1129 = vsyncadd [#allocation4], %s1128
      %s1130 = sshll.u32 [#allocation7], 4
      %s1131 = int_to_ptr.vmem [resolvable:$true] %s1130
      %1136 = dma.vmem_to_hbm [thread:$0]  %s1131, 256, %s5, [#allocation4], 128, 128, 8
    $region33: #{demo_attention.1} parent=1 // pred_fallthru
      _
    // Predicated region
    $region34: #{demo_attention.1} parent=1 // pred_check
      _
    $region35: #{demo_attention.1} parent=1 // pred_check_branch
      %1138 = sbr.rel (0) target = $region37
    $region36: #{demo_attention.1} parent=1 // pred_region
      %1139 = dma.done [#allocation4], 256
    $region37: #{demo_attention.1} parent=1 // pred_fallthru
      _
    %1140 = vsyncpa [#allocation3], 1
    %1141 = vsyncpa [#allocation6], 1
    %1142 = vsyncpa [#allocation4], 1

</llo_original>
